<compile_context>
chip_gen: v7x
topology: tpu7x:2x2x1
jax: 0.10.0
libtpu: 0.0.40
codegen_flags: <defaults>
</compile_context>

<pallas_src>
import functools

import numpy as np
import jax
import jax.numpy as jnp
from jax.experimental import pallas as pl
from jax.experimental.pallas import tpu as pltpu


# ----------------------------- MADE mask helpers -----------------------------
def _get_input_degrees(in_features: int) -> jnp.ndarray:
    """Degrees an input to MADE should have: 1..in_features."""
    return jnp.arange(1, in_features + 1, dtype=jnp.int32)


def _hidden_mask_and_degrees(in_degrees: jnp.ndarray,
                             out_features: int,
                             autoregressive_features: int):
    """Hidden-layer (is_output=False, random_mask=False) mask, shape (out, in)."""
    max_ = max(1, autoregressive_features - 1)
    min_ = min(1, autoregressive_features - 1)
    out_degrees = jnp.arange(out_features, dtype=jnp.int32) % max_ + min_
    mask = (out_degrees[:, None] >= in_degrees[None, :]).astype(jnp.float32)
    return mask, out_degrees


# ------------------- Pallas kernels: tiled matmul + bias + ReLU ---------------
def _masked_ff_kernel_accum(x_ref, w_ref, b_ref, o_ref):
    """f32-output variant: accumulate straight into the resident output tile.

    x_ref: (tm, tk) bf16   w_ref: (tk, tn) bf16 (masked & pre-transposed)
    b_ref: (1, tn)  f32    o_ref: (tm, tn) f32 (block index constant over k)
    """
    k = pl.program_id(2)

    @pl.when(k == 0)
    def _init():
        o_ref[...] = jnp.zeros_like(o_ref)

    o_ref[...] += jnp.dot(x_ref[...], w_ref[...],
                          preferred_element_type=jnp.float32)

    @pl.when(k == pl.num_programs(2) - 1)
    def _finalize():
        o_ref[...] = jnp.maximum(o_ref[...] + b_ref[...], 0.0)


def _masked_ff_kernel_scratch(x_ref, w_ref, b_ref, o_ref, acc_ref):
    """Low-precision-output variant: f32 VMEM scratch accumulator."""
    k = pl.program_id(2)

    @pl.when(k == 0)
    def _init():
        acc_ref[...] = jnp.zeros_like(acc_ref)

    acc_ref[...] += jnp.dot(x_ref[...], w_ref[...],
                            preferred_element_type=jnp.float32)

    @pl.when(k == pl.num_programs(2) - 1)
    def _finalize():
        o_ref[...] = jnp.maximum(acc_ref[...] + b_ref[...], 0.0).astype(o_ref.dtype)


# ----------------------------- wrapper / tiling -------------------------------
def _round_up(x: int, m: int) -> int:
    return (x + m - 1) // m * m


def _pick_tile(dim: int, max_tile: int = 1024) -> int:
    """Largest multiple of 128 that divides `dim` and is <= max_tile."""
    best, t = 128, 128
    while t <= min(dim, max_tile):
        if dim % t == 0:
            best = t
        t += 128
    return best


def _physical_vmem_bytes() -> int:
    try:
        info = pltpu.get_tpu_info()
        v = getattr(info, "vmem_capacity_bytes", None)
        if v:
            return int(v)
    except Exception:
        pass
    return 64 << 20  # conservative fallback (v7x per-TC size)


def _masked_ff_pallas(x, w_p, b_p, features, out_dtype):
    """x: (B, F) f32/bf16; w_p: (F_pad, F_pad) bf16 (masked, transposed, padded);
    b_p: (1, F_pad) f32. Returns (B, features) in out_dtype."""
    B, F = x.shape
    F_pad = w_p.shape[0]
    odt = np.dtype(out_dtype)
    is_f32_out = odt == np.dtype(np.float32)

    # --- tile / grid selection ---------------------------------------------
    B_pad = _round_up(B, 8)
    if B_pad <= 512:
        tm = B_pad                               # single M block, full batch tile
    else:
        B_pad = _round_up(B, 256)
        tm = 512 if B_pad % 512 == 0 else 256    # 256-multiples feed 2x256 MXUs well
    tn = _pick_tile(F_pad, 1024)
    tk = _pick_tile(F_pad, 1024)

    grid_m = B_pad // tm
    grid_n = F_pad // tn

    # v7x has 2 TensorCores: make sure >=2 blocks exist along a "parallel" axis
    # when the M x N grid would otherwise collapse to one block. Harmless on
    # single-TC v5e/v6e (one extra tiny grid step).
    if grid_m == 1 and grid_n == 1 and tn % 256 == 0:
        tn //= 2
        grid_n = F_pad // tn
    grid_k = F_pad // tk

    # --- pad activations (weights/bias were padded once, at layer init) ------
    x_p = jnp.pad(x, ((0, B_pad - B), (0, F_pad - F))).astype(jnp.bfloat16)

    # --- VMEM budget & cost estimate -----------------------------------------
    out_bytes = odt.itemsize
    acc_bytes = 0 if is_f32_out else tm * tn * 4
    vmem_est = (2 * (tm * tk + tk * tn) * 2      # double-buffered bf16 x / W tiles
                + 2 * 1 * tn * 4                 # bias tiles
                + 2 * tm * tn * out_bytes        # output tiles
                + acc_bytes)                     # f32 scratch (if any)
    phys_vmem = _physical_vmem_bytes()
    vmem_limit = int(min(max(2 * vmem_est, 8 << 20), int(0.75 * phys_vmem)))

    cost = pl.CostEstimate(
        flops=2 * B_pad * F_pad * F_pad,
        transcendentals=0,
        bytes_accessed=(B_pad * F_pad * 2 * grid_n      # x streamed per N block
                        + F_pad * F_pad * 2 * grid_m    # W streamed per M block
                        + B_pad * F_pad * out_bytes),   # output stores
    )

    if is_f32_out:
        kernel = _masked_ff_kernel_accum
        scratch = []
    else:
        kernel = _masked_ff_kernel_scratch
        scratch = [pltpu.VMEM((tm, tn), jnp.float32)]

    out_padded = pl.pallas_call(
        kernel,
        out_shape=jax.ShapeDtypeStruct((B_pad, F_pad), odt),
        grid_spec=pltpu.PrefetchScalarGridSpec(
            num_scalar_prefetch=0,
            grid=(grid_m, grid_n, grid_k),
            in_specs=[
                pl.BlockSpec((tm, tk), lambda i, j, k: (i, k)),   # x
                pl.BlockSpec((tk, tn), lambda i, j, k: (k, j)),   # masked W^T
                pl.BlockSpec((1, tn), lambda i, j, k: (0, j)),    # bias
            ],
            out_specs=pl.BlockSpec((tm, tn), lambda i, j, k: (i, j)),
            scratch_shapes=scratch,
        ),
        compiler_params=pltpu.CompilerParams(
            dimension_semantics=("parallel", "parallel", "arbitrary"),
            vmem_limit_bytes=vmem_limit,
        ),
        cost_estimate=cost,
    )(x_p, w_p, b_p)

    return out_padded[:B, :features]


def _masked_ff_forward(x, w_pallas, w_fast, b_pad, *, features, force_pallas,
                       out_dtype):
    """Dispatch: fused XLA fast path for tiny problems, Pallas kernel otherwise."""
    orig_shape = x.shape
    if x.ndim != 2:
        x = x.reshape(-1, orig_shape[-1])
    B, F = x.shape
    odt = np.dtype(out_dtype) if out_dtype is not None else np.dtype(x.dtype)

    if (not force_pallas) and F <= 512 and B <= 128:
        # Small-problem fast path: pallas_call launch + padding would dominate.
        y = jnp.dot(x, w_fast, preferred_element_type=jnp.float32) + b_pad[0, :F]
        out = jnp.maximum(y, 0.0).astype(odt)
    else:
        out = _masked_ff_pallas(x, w_pallas, b_pad, features, odt)

    return out.reshape(orig_shape[:-1] + (features,))


class MaskedFeedforwardBlockPallas:
    """JAX/Pallas equivalent of MaskedFeedforwardBlock (hidden MaskedLinear + ReLU).

    The masked / transposed / padded / bf16 weight is prepared ONCE at
    construction and cached, so the per-call path only pads activations and
    runs the tiled matmul kernel.
    """

    def __init__(self, in_degrees, autoregressive_features, *, weight=None,
                 bias=None, key=None, random_mask=False, out_dtype=None,
                 force_pallas=False):
        if random_mask:
            raise NotImplementedError("random_mask=True not implemented")
        features = int(in_degrees.shape[0])
        self.features = features

        mask, degrees = _hidden_mask_and_degrees(in_degrees, features,
                                                 autoregressive_features)
        self.mask = mask
        self.degrees = degrees

        if weight is None or bias is None:
            if key is None:
                key = jax.random.PRNGKey(0)
            weight, bias = init_params(key, features)
        self.weight = weight
        self.bias = bias

        # ---- one-time per-layer preprocessing (cached) ----------------------
        w_masked_t = (weight * mask).T.astype(jnp.float32)           # (in, out)
        F_pad = _round_up(features, 128)
        self._w_fast = w_masked_t                                     # fast path, f32
        self._w_pallas = jnp.pad(
            w_masked_t, ((0, F_pad - features), (0, F_pad - features))
        ).astype(jnp.bfloat16)                                        # kernel, bf16
        self._b_pad = jnp.pad(bias.astype(jnp.float32),
                              (0, F_pad - features)).reshape(1, F_pad)

        self._forward = jax.jit(functools.partial(
            _masked_ff_forward, features=features,
            force_pallas=force_pallas, out_dtype=out_dtype))

    def __call__(self, x, context=None):
        if context is not None:
            raise NotImplementedError("context conditioning not implemented")
        return self._forward(x, self._w_pallas, self._w_fast, self._b_pad)


# ---------------- Parameter setup (deterministic, mimics nn.Linear init) -----
def init_params(key, features):
    kw, kb = jax.random.split(key)
    bound = 1.0 / jnp.sqrt(features)
    weight = jax.random.uniform(kw, (features, features), jnp.float32,
                                -bound, bound)
    bias = jax.random.uniform(kb, (features,), jnp.float32, -bound, bound)
    return weight, bias


def reference(x, weight, mask, bias):
    return jnp.maximum(x @ (weight * mask).T + bias[None, :], 0.0)


if __name__ == "__main__":
    # --- small demo shape (consistent with the module) ------------------------
    batch = 8
    autoregressive_features = 32
    in_degrees = _get_input_degrees(autoregressive_features)
    features = int(in_degrees.shape[0])  # == autoregressive_features

    key = jax.random.PRNGKey(0)
    kx, kp = jax.random.split(key)
    x = jax.random.normal(kx, (batch, features), jnp.float32)
    weight, bias = init_params(kp, features)
    mask, _ = _hidden_mask_and_degrees(in_degrees, features,
                                       autoregressive_features)
    ref = reference(x, weight, mask, bias)

    # force_pallas=True so the demo shape exercises the Pallas kernel itself.
    block = MaskedFeedforwardBlockPallas(
        in_degrees, autoregressive_features, weight=weight, bias=bias,
        force_pallas=True)
    out = jax.block_until_ready(block(x))
    assert out.shape == (batch, features)
    # bf16 MXU inputs with f32 accumulation -> looser tolerance than pure f32.
    assert jnp.allclose(out, ref, atol=5e-2, rtol=5e-2), "pallas path mismatch"

    # Default dispatch takes the fused XLA fast path at this size: check it too.
    block_fast = MaskedFeedforwardBlockPallas(
        in_degrees, autoregressive_features, weight=weight, bias=bias)
    out_fast = jax.block_until_ready(block_fast(x))
    assert jnp.allclose(out_fast, ref, atol=1e-5, rtol=1e-5), "fast path mismatch"

    # Slightly larger shape: multi-block grid + bf16-output (scratch) kernel.
    batch2, ar2 = 192, 256
    in_deg2 = _get_input_degrees(ar2)
    kx2, kp2 = jax.random.split(jax.random.PRNGKey(1))
    x2 = jax.random.normal(kx2, (batch2, ar2), jnp.float32)
    w2, b2 = init_params(kp2, ar2)
    m2, _ = _hidden_mask_and_degrees(in_deg2, ar2, ar2)
    block2 = MaskedFeedforwardBlockPallas(
        in_deg2, ar2, weight=w2, bias=b2, force_pallas=True,
        out_dtype=jnp.bfloat16)
    out2 = jax.block_until_ready(block2(x2))
    ref2 = reference(x2, w2, m2, b2)
    assert out2.shape == (batch2, ar2)
    assert jnp.allclose(out2.astype(jnp.float32), ref2,
                        atol=5e-2, rtol=5e-2), "large-shape mismatch"

    print("KERNEL_OK")
</pallas_src>

<mosaic_0001>
module attributes {stable_mosaic.version = 11 : i64} {
  func.func @_masked_ff_kernel_accum(%arg0: i32, %arg1: i32, %arg2: i32, %arg3: memref<8x128xbf16, #tpu.memory_space<vmem>>, %arg4: memref<128x128xbf16, #tpu.memory_space<vmem>>, %arg5: memref<1x128xf32, #tpu.memory_space<vmem>>, %arg6: memref<8x128xf32, #tpu.memory_space<vmem>>) attributes {dimension_semantics = [#tpu.dimension_semantics<parallel>, #tpu.dimension_semantics<parallel>, #tpu.dimension_semantics<arbitrary>], iteration_bounds = array<i64: 1, 1, 1>, scalar_prefetch = 0 : i64, scratch_operands = 0 : i64, tpu.core_type = #tpu.core_type<tc>, window_params = [{transform_indices = @transform_0, window_bounds = array<i64: 8, 128>}, {transform_indices = @transform_1, window_bounds = array<i64: 128, 128>}, {transform_indices = @transform_2, window_bounds = array<i64: 1, 128>}, {transform_indices = @transform_3, window_bounds = array<i64: 8, 128>}]} {
    %c0_i32 = arith.constant 0 : i32
    %0 = arith.cmpi eq, %arg2, %c0_i32 : i32
    %1 = arith.extui %0 : i1 to i32
    %c0_i32_0 = arith.constant 0 : i32
    %2 = arith.cmpi ne, %1, %c0_i32_0 : i32
    scf.if %2 {
      %cst_10 = arith.constant 0.000000e+00 : f32
      %12 = vector.broadcast %cst_10 : f32 to vector<8x128xf32>
      %c0_11 = arith.constant 0 : index
      %c0_12 = arith.constant 0 : index
      %13 = vector.load %arg6[%c0_11, %c0_12] : memref<8x128xf32, #tpu.memory_space<vmem>>, vector<8x128xf32>
      tpu.vector_store %arg6[%c0_11, %c0_12], %12 {strides = array<i32>} : memref<8x128xf32, #tpu.memory_space<vmem>>, vector<8x128xf32>,
    } else {
    }
    %c0 = arith.constant 0 : index
    %c0_1 = arith.constant 0 : index
    %3 = vector.load %arg6[%c0, %c0_1] : memref<8x128xf32, #tpu.memory_space<vmem>>, vector<8x128xf32>
    %c0_2 = arith.constant 0 : index
    %c0_3 = arith.constant 0 : index
    %4 = vector.load %arg3[%c0_2, %c0_3] : memref<8x128xbf16, #tpu.memory_space<vmem>>, vector<8x128xbf16>
    %c0_4 = arith.constant 0 : index
    %c0_5 = arith.constant 0 : index
    %5 = vector.load %arg4[%c0_4, %c0_5] : memref<128x128xbf16, #tpu.memory_space<vmem>>, vector<128x128xbf16>
    %cst = arith.constant dense<0.000000e+00> : vector<8x128xf32>
    %6 = tpu.matmul %4, %5, %cst {dimension_numbers = #tpu.dot_dimension_numbers<[1], [0], [0], [1], [0, 0, 1, 1], [], []>} : vector<8x128xbf16>, vector<128x128xbf16>, vector<8x128xf32> -> vector<8x128xf32>
    %7 = arith.addf %3, %6 : vector<8x128xf32>
    %c0_6 = arith.constant 0 : index
    %c0_7 = arith.constant 0 : index
    %8 = vector.load %arg6[%c0_6, %c0_7] : memref<8x128xf32, #tpu.memory_space<vmem>>, vector<8x128xf32>
    tpu.vector_store %arg6[%c0_6, %c0_7], %7 {strides = array<i32>} : memref<8x128xf32, #tpu.memory_space<vmem>>, vector<8x128xf32>,
    %c0_i32_8 = arith.constant 0 : i32
    %9 = arith.cmpi eq, %arg2, %c0_i32_8 : i32
    %10 = arith.extui %9 : i1 to i32
    %c0_i32_9 = arith.constant 0 : i32
    %11 = arith.cmpi ne, %10, %c0_i32_9 : i32
    scf.if %11 {
      %c0_10 = arith.constant 0 : index
      %c0_11 = arith.constant 0 : index
      %12 = vector.load %arg6[%c0_10, %c0_11] : memref<8x128xf32, #tpu.memory_space<vmem>>, vector<8x128xf32>
      %c0_12 = arith.constant 0 : index
      %c0_13 = arith.constant 0 : index
      %13 = vector.load %arg5[%c0_12, %c0_13] : memref<1x128xf32, #tpu.memory_space<vmem>>, vector<1x128xf32>
      %14 = vector.broadcast %13 : vector<1x128xf32> to vector<8x128xf32>
      %15 = arith.addf %12, %14 : vector<8x128xf32>
      %cst_14 = arith.constant 0.000000e+00 : f32
      %16 = vector.broadcast %cst_14 : f32 to vector<8x128xf32>
      %17 = arith.maximumf %15, %16 : vector<8x128xf32>
      %c0_15 = arith.constant 0 : index
      %c0_16 = arith.constant 0 : index
      %18 = vector.load %arg6[%c0_15, %c0_16] : memref<8x128xf32, #tpu.memory_space<vmem>>, vector<8x128xf32>
      tpu.vector_store %arg6[%c0_15, %c0_16], %17 {strides = array<i32>} : memref<8x128xf32, #tpu.memory_space<vmem>>, vector<8x128xf32>,
    } else {
    }
    return
  }
  func.func @transform_0(%arg0: i32, %arg1: i32, %arg2: i32) -> (i32, i32) {
    %c0_i32 = arith.constant 0 : i32
    return %arg0, %arg2 : i32, i32
  }
  func.func @transform_1(%arg0: i32, %arg1: i32, %arg2: i32) -> (i32, i32) {
    %c0_i32 = arith.constant 0 : i32
    return %arg2, %arg1 : i32, i32
  }
  func.func @transform_2(%arg0: i32, %arg1: i32, %arg2: i32) -> (i32, i32) {
    %c0_i32 = arith.constant 0 : i32
    %c0_i32_0 = arith.constant 0 : i32
    return %c0_i32, %arg1 : i32, i32
  }
  func.func @transform_3(%arg0: i32, %arg1: i32, %arg2: i32) -> (i32, i32) {
    %c0_i32 = arith.constant 0 : i32
    return %arg0, %arg1 : i32, i32
  }
}

</mosaic_0001>

<llo_original>
// kernel: _masked_ff_forward.1
$region0: #{_masked_ff_forward.1}
  #allocation0 [shape = 'u32[]', space=smem, size = 0x4, offset = 0x4, fixed_abs, tag = 'smem constant byte address 0x4 - core index']
  #allocation1 [shape = 'u32[144,128]{1,0:T(1,128)}', space=vmem, size = 0x12000, scoped, tag = 'internal scratch']
  %s0 = inlined_call_operand.vmem [shape: bf16[8,128], index: 0, kind: input, shape index: {}]
  %s1 = inlined_call_operand.hbm [shape: bf16[128,128], index: 1, kind: input, shape index: {}]
  %s2 = inlined_call_operand.vmem [shape: f32[1,128], index: 2, kind: input, shape index: {}]
  %s3 = inlined_call_operand.hbm [shape: f32[8,128], index: 3, kind: output, shape index: {}]
  %s4 = sld [smem:[#allocation0]]
  $region34: #{_masked_ff_forward.1} parent=0
    _
  %s6 = ssub.s32 1, %s4
  %s7 = scalar_select 0, %s6, %s4
  $region1: #{_masked_ff_forward.1} parent=0
    #allocation2 [shape = 'u8[32768]{0}', space=vmem, size = 0x8000, scoped, tag = 'input window, operand 1, single buffered']
    #allocation3 [shape = 's32[1]{0}', space=sflag, size = 0x4, scoped, tag = 'scoped memory for _masked_ff_forward.1']
    #allocation4 [shape = 's32[1]{0}', space=sflag, size = 0x4, scoped, tag = 'scoped memory for _masked_ff_forward.1']
    #allocation5 [shape = 'u8[4096]{0}', space=vmem, size = 0x1000, scoped, tag = 'output window, operand 0, single buffered']
    %8 = vsyncpa [#allocation3], 0
    %9 = vsyncpa [#allocation4], 0
    // Predicated region
    $region2: #{_masked_ff_forward.1} parent=1 // pred_check
      _
    $region3: #{_masked_ff_forward.1} parent=1 // pred_check_branch
      %11 = sbr.rel (0) target = $region5
    $region4: #{_masked_ff_forward.1} parent=1 // pred_region
      _
    $region5: #{_masked_ff_forward.1} parent=1 // pred_fallthru
      _
    // Predicated region
    $region6: #{_masked_ff_forward.1} parent=1 // pred_check
      _
    $region7: #{_masked_ff_forward.1} parent=1 // pred_check_branch
      %13 = sbr.rel (0) target = $region9
    $region8: #{_masked_ff_forward.1} parent=1 // pred_region
      %s15 = ssub.s32 1024, 1024
      %16 = vsyncadd [#allocation3], %s15
      %s17 = sshll.u32 [#allocation2], 4
      %s18 = int_to_ptr.vmem [resolvable:$true] %s17
      %23 = dma.hbm_to_vmem [thread:$0]  %s1, 1024, %s18, [#allocation3], 64, 64, 4
    $region9: #{_masked_ff_forward.1} parent=1 // pred_fallthru
      _
    // Predicated region
    $region10: #{_masked_ff_forward.1} parent=1 // pred_check
      _
    $region11: #{_masked_ff_forward.1} parent=1 // pred_check_branch
      %25 = sbr.rel (0) target = $region13
    $region12: #{_masked_ff_forward.1} parent=1 // pred_region
      _
    $region13: #{_masked_ff_forward.1} parent=1 // pred_fallthru
      _
    // Predicated region
    $region14: #{_masked_ff_forward.1} parent=1 // pred_check
      _
    $region15: #{_masked_ff_forward.1} parent=1 // pred_check_branch
      %27 = sbr.rel (0) target = $region17
    $region16: #{_masked_ff_forward.1} parent=1 // pred_region
      %28 = dma.done [#allocation3], 1024
    $region17: #{_masked_ff_forward.1} parent=1 // pred_fallthru
      _
    %p30 = scmp.eq.s32.totalorder 0, 0
    // Predicated region
    $region18: #{_masked_ff_forward.1} parent=1 // pred_check
      %p31 = pneg %p30
    $region19: #{_masked_ff_forward.1} parent=1 // pred_check_branch
      %33 = sbr.rel (%p31) target = $region21
    $region20: #{_masked_ff_forward.1} parent=1 // pred_region
      %34 = vst [vmem:[#allocation5] sm:$0xff] 0.0
    $region21: #{_masked_ff_forward.1} parent=1 // pred_fallthru
      _
    %v35 = vld [vmem:[#allocation5] sm:$0xff]
    %v36 = vld [vmem:[%s0] sm:$0xf]
    %v37 = vld [vmem:[#allocation2] sm:$0xf]
    %v38 = vld [vmem:[#allocation2 + $0x4] sm:$0xf]
    %v39 = vld [vmem:[#allocation2 + $0x8] sm:$0xf]
    %v40 = vld [vmem:[#allocation2 + $0xc] sm:$0xf]
    %v41 = vld [vmem:[#allocation2 + $0x10] sm:$0xf]
    %v42 = vld [vmem:[#allocation2 + $0x14] sm:$0xf]
    %v43 = vld [vmem:[#allocation2 + $0x18] sm:$0xf]
    %v44 = vld [vmem:[#allocation2 + $0x1c] sm:$0xf]
    %v45 = vld [vmem:[#allocation2 + $0x20] sm:$0xf]
    %v46 = vld [vmem:[#allocation2 + $0x24] sm:$0xf]
    %v47 = vld [vmem:[#allocation2 + $0x28] sm:$0xf]
    %v48 = vld [vmem:[#allocation2 + $0x2c] sm:$0xf]
    %v49 = vld [vmem:[#allocation2 + $0x30] sm:$0xf]
    %v50 = vld [vmem:[#allocation2 + $0x34] sm:$0xf]
    %v51 = vld [vmem:[#allocation2 + $0x38] sm:$0xf]
    %v52 = vld [vmem:[#allocation2 + $0x3c] sm:$0xf]
    %v69 = vunpack.c.l.b16 %v37
    %v70 = vunpack.c.l.b16 %v38
    %v71 = vunpack.c.l.b16 %v39
    %v72 = vunpack.c.l.b16 %v40
    %v73 = vunpack.c.l.b16 %v41
    %v74 = vunpack.c.l.b16 %v42
    %v75 = vunpack.c.l.b16 %v43
    %v76 = vunpack.c.l.b16 %v44
    %v77 = vunpack.c.l.b16 %v45
    %v78 = vunpack.c.l.b16 %v46
    %v79 = vunpack.c.l.b16 %v47
    %v80 = vunpack.c.l.b16 %v48
    %v81 = vunpack.c.l.b16 %v49
    %v82 = vunpack.c.l.b16 %v50
    %v83 = vunpack.c.l.b16 %v51
    %v84 = vunpack.c.l.b16 %v52
    %v85 = vpack.c.b16 %v70, %v69
    %v86 = vpack.c.b16 %v72, %v71
    %v87 = vpack.c.b16 %v74, %v73
    %v88 = vpack.c.b16 %v76, %v75
    %v89 = vpack.c.b16 %v78, %v77
    %v90 = vpack.c.b16 %v80, %v79
    %v91 = vpack.c.b16 %v82, %v81
    %v92 = vpack.c.b16 %v84, %v83
    %101 = vmatprep.subr.bf16.mxu0 0
    %102 = vmatpush1.bf16.msra.mxu0 %v85
    %103 = vmatprep.subr.bf16.mxu0 0
    %104 = vmatpush1.bf16.msra.mxu0 %v86
    %105 = vmatprep.subr.bf16.mxu0 0
    %106 = vmatpush1.bf16.msra.mxu0 %v87
    %107 = vmatprep.subr.bf16.mxu0 0
    %108 = vmatpush1.bf16.msra.mxu0 %v88
    %109 = vmatprep.subr.bf16.mxu0 0
    %110 = vmatpush1.bf16.msra.mxu0 %v89
    %111 = vmatprep.subr.bf16.mxu0 0
    %112 = vmatpush1.bf16.msra.mxu0 %v90
    %113 = vmatprep.subr.bf16.mxu0 0
    %114 = vmatpush1.bf16.msra.mxu0 %v91
    %115 = vmatprep.subr.bf16.mxu0 0
    %116 = vmatpush1.bf16.msra.mxu0 %v92
    %117 = vmatprep.subr.bf16.mxu0 0
    %118 = vmatpush1.bf16.msra.mxu0 0
    %119 = vmatprep.subr.bf16.mxu0 0
    %120 = vmatpush1.bf16.msra.mxu0 0
    %121 = vmatprep.subr.bf16.mxu0 0
    %122 = vmatpush1.bf16.msra.mxu0 0
    %123 = vmatprep.subr.bf16.mxu0 0
    %124 = vmatpush1.bf16.msra.mxu0 0
    %125 = vmatprep.subr.bf16.mxu0 0
    %126 = vmatpush1.bf16.msra.mxu0 0
    %127 = vmatprep.subr.bf16.mxu0 0
    %128 = vmatpush1.bf16.msra.mxu0 0
    %129 = vmatprep.subr.bf16.mxu0 0
    %130 = vmatpush1.bf16.msra.mxu0 0
    %131 = vmatprep.subr.bf16.mxu0 0
    %132 = vmatpush1.bf16.msra.mxu0 0
    %133 = vmatprep.mubr.bf16.mxu0 0
    %134 = vmatmul.mubr.bf16.gmra.mrb[0].mxu0 %v36
    %v135 = vpop.f32.mrb[0].mxu0
    %v136 = vadd.f32 0.0, %v135
    %v137 = vpop.f32.mrb[0].mxu0
    %v138 = vpop.f32.mrb[0].mxu0
    %v139 = vpop.f32.mrb[0].mxu0
    %140 = vdwg.mxu0
    %v141 = vadd.f32 %v35, %v136
    %142 = vst [vmem:[#allocation5] sm:$0xff] %v141
    // Predicated region
    $region22: #{_masked_ff_forward.1} parent=1 // pred_check
      %p143 = pneg %p30
    $region23: #{_masked_ff_forward.1} parent=1 // pred_check_branch
      %145 = sbr.rel (%p143) target = $region25
    $region24: #{_masked_ff_forward.1} parent=1 // pred_region
      %v146 = vld [vmem:[#allocation5] sm:$0xff]
      %v147 = vld [vmem:[%s2] sm:$0x1]
      %v149 = vlaneseq
      %v150 = vshrl.u32 %v149, 7
      %v151 = vsub.s32 0, %v150
      %v152 = vrot.slane %v147, %v151
      %v154 = vadd.f32 %v146, %v152
      %v155 = vmax.f32 %v154, 0.0
      %156 = vst [vmem:[#allocation5] sm:$0xff] %v155
    $region25: #{_masked_ff_forward.1} parent=1 // pred_fallthru
      _
    // Predicated region
    $region26: #{_masked_ff_forward.1} parent=1 // pred_check
      _
    $region27: #{_masked_ff_forward.1} parent=1 // pred_check_branch
      %158 = sbr.rel (0) target = $region29
    $region28: #{_masked_ff_forward.1} parent=1 // pred_region
      %s160 = ssub.s32 128, 128
      %161 = vsyncadd [#allocation4], %s160
      %s163 = sshll.u32 [#allocation5], 4
      %s164 = int_to_ptr.vmem [resolvable:$true] %s163
      %166 = dma.vmem_to_hbm [thread:$0]  %s164, 128, %s3, [#allocation4]
    $region29: #{_masked_ff_forward.1} parent=1 // pred_fallthru
      _
    // Predicated region
    $region30: #{_masked_ff_forward.1} parent=1 // pred_check
      _
    $region31: #{_masked_ff_forward.1} parent=1 // pred_check_branch
      %168 = sbr.rel (0) target = $region33
    $region32: #{_masked_ff_forward.1} parent=1 // pred_region
      %169 = dma.done [#allocation4], 128
    $region33: #{_masked_ff_forward.1} parent=1 // pred_fallthru
      _
    %170 = vsyncpa [#allocation3], 1
    %171 = vsyncpa [#allocation4], 1

</llo_original>
